<compile_context>
chip_gen: v6e
topology: v6e:2x2x1
jax: 0.10.0
libtpu: 0.0.40
codegen_flags: <defaults>
</compile_context>

<pallas_src>
import functools

import jax
import jax.numpy as jnp
from jax import lax
from jax.experimental import pallas as pl
from jax.experimental.pallas import tpu as pltpu


def _round_up(n: int, m: int) -> int:
    return ((n + m - 1) // m) * m


# --------------------------------------------------------------------------- #
# Pass 1: attention branch + first Linear + masked BN partial statistics.
# --------------------------------------------------------------------------- #
def _pass1_kernel(x_ref, wa_ref, w1_ref, bias_ref,
                  a_ref, xnew_ref, h1_ref, psum_ref, psumsq_ref,
                  *, batch, tile_b, d_p, h1_p):
    dn = (((1,), (1,)), ((), ()))        # contract activation dim 1 with W dim 1
    mm_dtype = wa_ref.dtype

    x = x_ref[...]                       # (tile_b, D_p) f32
    ba = bias_ref[0:1, :d_p]             # (1, D_p)
    b1 = bias_ref[1:2, :h1_p]            # (1, H1_p)

    # atten: tanh(x @ Wa^T + ba)
    a = jnp.tanh(
        lax.dot_general(x.astype(mm_dtype), wa_ref[...], dn,
                        preferred_element_type=jnp.float32) + ba)
    a_ref[...] = a

    x_new = x * jnp.exp(a)
    xnew_ref[...] = x_new

    # first Linear of the `out` branch (pre-BatchNorm)
    h1 = lax.dot_general(x_new.astype(mm_dtype), w1_ref[...], dn,
                         preferred_element_type=jnp.float32) + b1
    h1_ref[...] = h1

    # Masked partial sums for full-batch BN statistics (padded rows excluded).
    row = (pl.program_id(0) * tile_b
           + lax.broadcasted_iota(jnp.int32, (tile_b, 1), 0))
    valid = (row < batch).astype(jnp.float32)          # (tile_b, 1)
    h1m = h1 * valid
    g = tile_b // 8
    psum_ref[...] = jnp.sum(h1m.reshape(g, 8, h1_p), axis=0)          # (8, H1_p)
    psumsq_ref[...] = jnp.sum((h1m * h1m).reshape(g, 8, h1_p), axis=0)


# --------------------------------------------------------------------------- #
# Pass 2: BN affine + ReLU + Linear + ReLU + Linear.
# --------------------------------------------------------------------------- #
def _pass2_kernel(h1_ref, w2_ref, w3_ref, pack_ref, out_ref,
                  *, h1_p, h2_p, o_p):
    dn = (((1,), (1,)), ((), ()))
    mm_dtype = w2_ref.dtype

    bn_scale = pack_ref[0:1, :h1_p]
    bn_shift = pack_ref[1:2, :h1_p]
    b2 = pack_ref[2:3, :h2_p]
    b3 = pack_ref[3:4, :o_p]

    h1bn = jnp.maximum(h1_ref[...] * bn_scale + bn_shift, 0.0)
    h2 = jnp.maximum(
        lax.dot_general(h1bn.astype(mm_dtype), w2_ref[...], dn,
                        preferred_element_type=jnp.float32) + b2, 0.0)
    out_ref[...] = lax.dot_general(h2.astype(mm_dtype), w3_ref[...], dn,
                                   preferred_element_type=jnp.float32) + b3


# --------------------------------------------------------------------------- #
# Wrapper
# --------------------------------------------------------------------------- #
def mlp_forward(x, params, *, tile_b=256, use_bf16_matmul=False):
    """Forward pass of the FedMD MLP; returns (a, x_new, out).

    params holds PyTorch-shaped tensors: w* are (out_features, in_features),
    b*/gamma/beta are 1-D.  BatchNorm uses training-mode full-batch statistics.
    """
    B, D = x.shape
    H1 = params["w1"].shape[0]
    H2 = params["w2"].shape[0]
    O = params["w3"].shape[0]

    # Lane-dense / MXU-aligned padding; batch padded to a multiple of the tile.
    D_p, H1_p, H2_p, O_p = (_round_up(n, 128) for n in (D, H1, H2, O))
    tile_b = min(tile_b, _round_up(B, 8))
    B_p = _round_up(B, tile_b)
    nt = B_p // tile_b

    f32 = jnp.float32
    mm_dtype = jnp.bfloat16 if use_bf16_matmul else f32
    mm_bytes = jnp.dtype(mm_dtype).itemsize

    def pad_mat(w, rows, cols):
        w = w.astype(f32)
        return jnp.pad(w, ((0, rows - w.shape[0]), (0, cols - w.shape[1])))

    def pad_vec(v, n):
        v = v.astype(f32).reshape(1, -1)
        return jnp.pad(v, ((0, 0), (0, n - v.shape[1])))

    x_p = jnp.pad(x.astype(f32), ((0, B_p - B), (0, D_p - D)))

    # Weights stay PyTorch-(out, in): no transposes emitted per call.
    wa = pad_mat(params["wa"], D_p, D_p).astype(mm_dtype)
    w1 = pad_mat(params["w1"], H1_p, D_p).astype(mm_dtype)
    w2 = pad_mat(params["w2"], H2_p, H1_p).astype(mm_dtype)
    w3 = pad_mat(params["w3"], O_p, H2_p).astype(mm_dtype)

    # Pass-1 bias pack: row 0 = ba, row 1 = b1  (one DMA instead of two).
    wmax1 = max(D_p, H1_p)
    bias1 = jnp.concatenate(
        [pad_vec(params["ba"], wmax1), pad_vec(params["b1"], wmax1)], axis=0)

    def resident(shape):
        return pl.BlockSpec(shape, lambda i: (0,) * len(shape))

    def batched(last):
        return pl.BlockSpec((tile_b, last), lambda i: (i, 0))

    flops1 = 2 * B_p * (D_p * D_p + D_p * H1_p)
    bytes1 = (x_p.size * 4 + (wa.size + w1.size) * mm_bytes + bias1.size * 4
              + B_p * (2 * D_p + H1_p) * 4 + 2 * nt * 8 * H1_p * 4)

    a_p, xnew_p, h1_full, psum, psumsq = pl.pallas_call(
        functools.partial(_pass1_kernel, batch=B, tile_b=tile_b,
                          d_p=D_p, h1_p=H1_p),
        grid=(nt,),
        in_specs=[
            batched(D_p),                                # x tile
            resident((D_p, D_p)),                        # Wa (resident)
            resident((H1_p, D_p)),                       # W1 (resident)
            resident((2, wmax1)),                        # [ba; b1]
        ],
        out_specs=(
            batched(D_p),                                # a
            batched(D_p),                                # x_new
            batched(H1_p),                               # h1 (pre-BN)
            pl.BlockSpec((8, H1_p), lambda i: (i, 0)),   # sum partials
            pl.BlockSpec((8, H1_p), lambda i: (i, 0)),   # sum-of-squares partials
        ),
        out_shape=(
            jax.ShapeDtypeStruct((B_p, D_p), f32),
            jax.ShapeDtypeStruct((B_p, D_p), f32),
            jax.ShapeDtypeStruct((B_p, H1_p), f32),
            jax.ShapeDtypeStruct((nt * 8, H1_p), f32),
            jax.ShapeDtypeStruct((nt * 8, H1_p), f32),
        ),
        compiler_params=pltpu.CompilerParams(
            dimension_semantics=("parallel",)),
        cost_estimate=pl.CostEstimate(
            flops=flops1, transcendentals=2 * B_p * D_p, bytes_accessed=bytes1),
    )(x_p, wa, w1, bias1)

    # Fold full-batch BN statistics + gamma/beta into one affine (tiny XLA ops).
    sum_h1 = jnp.sum(psum, axis=0)
    sumsq_h1 = jnp.sum(psumsq, axis=0)
    mean = sum_h1 / B
    var = jnp.maximum(sumsq_h1 / B - mean * mean, 0.0)   # biased variance
    inv_std = lax.rsqrt(var + 1e-5)
    gamma = pad_vec(params["gamma"], H1_p)[0]
    beta = pad_vec(params["beta"], H1_p)[0]
    bn_scale = gamma * inv_std
    bn_shift = beta - mean * bn_scale

    # Pass-2 pack: rows = [bn_scale, bn_shift, b2, b3]  (single DMA).
    wmax2 = max(H1_p, H2_p, O_p)
    pack2 = jnp.concatenate(
        [pad_vec(bn_scale, wmax2), pad_vec(bn_shift, wmax2),
         pad_vec(params["b2"], wmax2), pad_vec(params["b3"], wmax2)], axis=0)

    flops2 = 2 * B_p * (H1_p * H2_p + H2_p * O_p)
    bytes2 = (B_p * H1_p * 4 + (w2.size + w3.size) * mm_bytes
              + pack2.size * 4 + B_p * O_p * 4)

    out_p = pl.pallas_call(
        functools.partial(_pass2_kernel, h1_p=H1_p, h2_p=H2_p, o_p=O_p),
        grid=(nt,),
        in_specs=[
            batched(H1_p),                               # h1 tile
            resident((H2_p, H1_p)),                      # W2 (resident)
            resident((O_p, H2_p)),                       # W3 (resident)
            resident((4, wmax2)),                        # [scale; shift; b2; b3]
        ],
        out_specs=batched(O_p),
        out_shape=jax.ShapeDtypeStruct((B_p, O_p), f32),
        compiler_params=pltpu.CompilerParams(
            dimension_semantics=("parallel",)),
        cost_estimate=pl.CostEstimate(
            flops=flops2, transcendentals=0, bytes_accessed=bytes2),
    )(h1_full, w2, w3, pack2)

    # Strip feature/batch padding.
    return a_p[:B, :D], xnew_p[:B, :D], out_p[:B, :O]


# --------------------------------------------------------------------------- #
# Pure-JAX reference (PyTorch training-mode semantics).
# --------------------------------------------------------------------------- #
def _reference(x, p):
    a = jnp.tanh(x @ p["wa"].T + p["ba"])
    x_new = x * jnp.exp(a)
    h1 = x_new @ p["w1"].T + p["b1"]
    mean = jnp.mean(h1, axis=0, keepdims=True)
    var = jnp.mean((h1 - mean) ** 2, axis=0, keepdims=True)
    h1 = p["gamma"] * (h1 - mean) / jnp.sqrt(var + 1e-5) + p["beta"]
    h1 = jnp.maximum(h1, 0.0)
    h2 = jnp.maximum(h1 @ p["w2"].T + p["b2"], 0.0)
    out = h2 @ p["w3"].T + p["b3"]
    return a, x_new, out


if __name__ == "__main__":
    # MLP(input_dim=32, hidden1=64, hidden2=32, output_dim=16), batch=8.
    B, D, H1, H2, O = 8, 32, 64, 32, 16

    key = jax.random.PRNGKey(0)
    ks = jax.random.split(key, 9)

    def uinit(k, shape, fan_in):
        bound = 1.0 / jnp.sqrt(fan_in)
        return jax.random.uniform(k, shape, jnp.float32, -bound, bound)

    params = {
        "wa": uinit(ks[0], (D, D), D),    "ba": uinit(ks[1], (D,), D),
        "w1": uinit(ks[2], (H1, D), D),   "b1": uinit(ks[3], (H1,), D),
        "gamma": jnp.ones((H1,), jnp.float32),
        "beta": jnp.zeros((H1,), jnp.float32),
        "w2": uinit(ks[4], (H2, H1), H1), "b2": uinit(ks[5], (H2,), H1),
        "w3": uinit(ks[6], (O, H2), H2),  "b3": uinit(ks[7], (O,), H2),
    }
    x = jax.random.normal(ks[8], (B, D), jnp.float32)

    fwd_f32 = jax.jit(functools.partial(mlp_forward, use_bf16_matmul=False))
    fwd_bf16 = jax.jit(functools.partial(mlp_forward, use_bf16_matmul=True))

    a, x_new, out = fwd_f32(x, params)
    jax.block_until_ready((a, x_new, out))

    a_r, xn_r, out_r = _reference(x, params)
    assert jnp.allclose(a, a_r, atol=1e-5), "atten mismatch (f32)"
    assert jnp.allclose(x_new, xn_r, atol=1e-5), "x_new mismatch (f32)"
    assert jnp.allclose(out, out_r, atol=2e-4), "out mismatch (f32)"

    # bf16-operand / f32-accumulation path (v6e / v7x MXU-native); loose check.
    a_b, xn_b, out_b = fwd_bf16(x, params)
    jax.block_until_ready((a_b, xn_b, out_b))
    assert bool(jnp.all(jnp.isfinite(out_b))), "bf16 path non-finite"
    assert jnp.allclose(out_b, out_r, atol=0.5), "out mismatch (bf16)"

    print("KERNEL_OK")
</pallas_src>

<mosaic_0001>
module attributes {stable_mosaic.version = 11 : i64} {
  func.func @_pass1_kernel(%arg0: i32, %arg1: memref<8x128xf32, #tpu.memory_space<vmem>>, %arg2: memref<128x128xf32, #tpu.memory_space<vmem>>, %arg3: memref<128x128xf32, #tpu.memory_space<vmem>>, %arg4: memref<2x128xf32, #tpu.memory_space<vmem>>, %arg5: memref<8x128xf32, #tpu.memory_space<vmem>>, %arg6: memref<8x128xf32, #tpu.memory_space<vmem>>, %arg7: memref<8x128xf32, #tpu.memory_space<vmem>>, %arg8: memref<8x128xf32, #tpu.memory_space<vmem>>, %arg9: memref<8x128xf32, #tpu.memory_space<vmem>>) attributes {dimension_semantics = [#tpu.dimension_semantics<parallel>], iteration_bounds = array<i64: 1>, scalar_prefetch = 0 : i64, scratch_operands = 0 : i64, tpu.core_type = #tpu.core_type<tc>, window_params = [{transform_indices = @transform_0, window_bounds = array<i64: 8, 128>}, {pipeline_mode = #tpu.pipeline_mode<synchronous>, transform_indices = @transform_1, window_bounds = array<i64: 128, 128>}, {pipeline_mode = #tpu.pipeline_mode<synchronous>, transform_indices = @transform_2, window_bounds = array<i64: 128, 128>}, {pipeline_mode = #tpu.pipeline_mode<synchronous>, transform_indices = @transform_3, window_bounds = array<i64: 2, 128>}, {transform_indices = @transform_4, window_bounds = array<i64: 8, 128>}, {transform_indices = @transform_5, window_bounds = array<i64: 8, 128>}, {transform_indices = @transform_6, window_bounds = array<i64: 8, 128>}, {transform_indices = @transform_7, window_bounds = array<i64: 8, 128>}, {transform_indices = @transform_8, window_bounds = array<i64: 8, 128>}]} {
    %c0 = arith.constant 0 : index
    %c0_0 = arith.constant 0 : index
    %0 = vector.load %arg1[%c0, %c0_0] : memref<8x128xf32, #tpu.memory_space<vmem>>, vector<8x128xf32>
    %c0_1 = arith.constant 0 : index
    %c0_2 = arith.constant 0 : index
    %1 = vector.load %arg4[%c0_1, %c0_2] : memref<2x128xf32, #tpu.memory_space<vmem>>, vector<1x128xf32>
    %c1 = arith.constant 1 : index
    %c0_3 = arith.constant 0 : index
    %2 = vector.load %arg4[%c1, %c0_3] : memref<2x128xf32, #tpu.memory_space<vmem>>, vector<1x128xf32>
    %c0_4 = arith.constant 0 : index
    %c0_5 = arith.constant 0 : index
    %3 = vector.load %arg2[%c0_4, %c0_5] : memref<128x128xf32, #tpu.memory_space<vmem>>, vector<128x128xf32>
    %cst = arith.constant dense<0.000000e+00> : vector<8x128xf32>
    %4 = tpu.matmul %0, %3, %cst {dimension_numbers = #tpu.dot_dimension_numbers<[1], [1], [0], [0], [0, 0, 1, 0], [], []>} : vector<8x128xf32>, vector<128x128xf32>, vector<8x128xf32> -> vector<8x128xf32>
    %5 = vector.broadcast %1 : vector<1x128xf32> to vector<8x128xf32>
    %6 = arith.addf %4, %5 : vector<8x128xf32>
    %7 = math.tanh %6 : vector<8x128xf32>
    %c0_6 = arith.constant 0 : index
    %c0_7 = arith.constant 0 : index
    %8 = vector.load %arg5[%c0_6, %c0_7] : memref<8x128xf32, #tpu.memory_space<vmem>>, vector<8x128xf32>
    tpu.vector_store %arg5[%c0_6, %c0_7], %7 {strides = array<i32>} : memref<8x128xf32, #tpu.memory_space<vmem>>, vector<8x128xf32>,
    %9 = math.exp %7 : vector<8x128xf32>
    %10 = arith.mulf %0, %9 : vector<8x128xf32>
    %c0_8 = arith.constant 0 : index
    %c0_9 = arith.constant 0 : index
    %11 = vector.load %arg6[%c0_8, %c0_9] : memref<8x128xf32, #tpu.memory_space<vmem>>, vector<8x128xf32>
    tpu.vector_store %arg6[%c0_8, %c0_9], %10 {strides = array<i32>} : memref<8x128xf32, #tpu.memory_space<vmem>>, vector<8x128xf32>,
    %c0_10 = arith.constant 0 : index
    %c0_11 = arith.constant 0 : index
    %12 = vector.load %arg3[%c0_10, %c0_11] : memref<128x128xf32, #tpu.memory_space<vmem>>, vector<128x128xf32>
    %cst_12 = arith.constant dense<0.000000e+00> : vector<8x128xf32>
    %13 = tpu.matmul %10, %12, %cst_12 {dimension_numbers = #tpu.dot_dimension_numbers<[1], [1], [0], [0], [0, 0, 1, 0], [], []>} : vector<8x128xf32>, vector<128x128xf32>, vector<8x128xf32> -> vector<8x128xf32>
    %14 = vector.broadcast %2 : vector<1x128xf32> to vector<8x128xf32>
    %15 = arith.addf %13, %14 : vector<8x128xf32>
    %c0_13 = arith.constant 0 : index
    %c0_14 = arith.constant 0 : index
    %16 = vector.load %arg7[%c0_13, %c0_14] : memref<8x128xf32, #tpu.memory_space<vmem>>, vector<8x128xf32>
    tpu.vector_store %arg7[%c0_13, %c0_14], %15 {strides = array<i32>} : memref<8x128xf32, #tpu.memory_space<vmem>>, vector<8x128xf32>,
    %c8_i32 = arith.constant 8 : i32
    %17 = arith.muli %arg0, %c8_i32 : i32
    %18 = tpu.iota {dimensions = array<i32: 0>} : vector<8x1xi32>
    %19 = vector.broadcast %17 : i32 to vector<8x1xi32>
    %20 = arith.addi %19, %18 : vector<8x1xi32>
    %c8_i32_15 = arith.constant 8 : i32
    %21 = vector.broadcast %c8_i32_15 : i32 to vector<8x1xi32>
    %22 = arith.cmpi slt, %20, %21 : vector<8x1xi32>
    %23 = arith.extui %22 : vector<8x1xi1> to vector<8x1xi32>
    %24 = arith.sitofp %23 : vector<8x1xi32> to vector<8x1xf32>
    %25 = vector.broadcast %24 : vector<8x1xf32> to vector<8x128xf32>
    %26 = arith.mulf %15, %25 : vector<8x128xf32>
    %27 = vector.shape_cast %26 : vector<8x128xf32> to vector<1x8x128xf32>
    %cst_16 = arith.constant dense<0.000000e+00> : vector<8x128xf32>
    %28 = vector.multi_reduction <add>, %27, %cst_16 [0] : vector<1x8x128xf32> to vector<8x128xf32>
    %c0_17 = arith.constant 0 : index
    %c0_18 = arith.constant 0 : index
    %29 = vector.load %arg8[%c0_17, %c0_18] : memref<8x128xf32, #tpu.memory_space<vmem>>, vector<8x128xf32>
    tpu.vector_store %arg8[%c0_17, %c0_18], %28 {strides = array<i32>} : memref<8x128xf32, #tpu.memory_space<vmem>>, vector<8x128xf32>,
    %30 = arith.mulf %26, %26 : vector<8x128xf32>
    %31 = vector.shape_cast %30 : vector<8x128xf32> to vector<1x8x128xf32>
    %cst_19 = arith.constant dense<0.000000e+00> : vector<8x128xf32>
    %32 = vector.multi_reduction <add>, %31, %cst_19 [0] : vector<1x8x128xf32> to vector<8x128xf32>
    %c0_20 = arith.constant 0 : index
    %c0_21 = arith.constant 0 : index
    %33 = vector.load %arg9[%c0_20, %c0_21] : memref<8x128xf32, #tpu.memory_space<vmem>>, vector<8x128xf32>
    tpu.vector_store %arg9[%c0_20, %c0_21], %32 {strides = array<i32>} : memref<8x128xf32, #tpu.memory_space<vmem>>, vector<8x128xf32>,
    return
  }
  func.func @transform_0(%arg0: i32) -> (i32, i32) {
    %c0_i32 = arith.constant 0 : i32
    %c0_i32_0 = arith.constant 0 : i32
    return %arg0, %c0_i32 : i32, i32
  }
  func.func @transform_1(%arg0: i32) -> (i32, i32) {
    %c0_i32 = arith.constant 0 : i32
    %c0_i32_0 = arith.constant 0 : i32
    %c0_i32_1 = arith.constant 0 : i32
    return %c0_i32, %c0_i32_0 : i32, i32
  }
  func.func @transform_2(%arg0: i32) -> (i32, i32) {
    %c0_i32 = arith.constant 0 : i32
    %c0_i32_0 = arith.constant 0 : i32
    %c0_i32_1 = arith.constant 0 : i32
    return %c0_i32, %c0_i32_0 : i32, i32
  }
  func.func @transform_3(%arg0: i32) -> (i32, i32) {
    %c0_i32 = arith.constant 0 : i32
    %c0_i32_0 = arith.constant 0 : i32
    %c0_i32_1 = arith.constant 0 : i32
    return %c0_i32, %c0_i32_0 : i32, i32
  }
  func.func @transform_4(%arg0: i32) -> (i32, i32) {
    %c0_i32 = arith.constant 0 : i32
    %c0_i32_0 = arith.constant 0 : i32
    return %arg0, %c0_i32 : i32, i32
  }
  func.func @transform_5(%arg0: i32) -> (i32, i32) {
    %c0_i32 = arith.constant 0 : i32
    %c0_i32_0 = arith.constant 0 : i32
    return %arg0, %c0_i32 : i32, i32
  }
  func.func @transform_6(%arg0: i32) -> (i32, i32) {
    %c0_i32 = arith.constant 0 : i32
    %c0_i32_0 = arith.constant 0 : i32
    return %arg0, %c0_i32 : i32, i32
  }
  func.func @transform_7(%arg0: i32) -> (i32, i32) {
    %c0_i32 = arith.constant 0 : i32
    %c0_i32_0 = arith.constant 0 : i32
    return %arg0, %c0_i32 : i32, i32
  }
  func.func @transform_8(%arg0: i32) -> (i32, i32) {
    %c0_i32 = arith.constant 0 : i32
    %c0_i32_0 = arith.constant 0 : i32
    return %arg0, %c0_i32 : i32, i32
  }
}

module attributes {stable_mosaic.version = 11 : i64} {
  func.func @_pass2_kernel(%arg0: i32, %arg1: memref<8x128xf32, #tpu.memory_space<vmem>>, %arg2: memref<128x128xf32, #tpu.memory_space<vmem>>, %arg3: memref<128x128xf32, #tpu.memory_space<vmem>>, %arg4: memref<4x128xf32, #tpu.memory_space<vmem>>, %arg5: memref<8x128xf32, #tpu.memory_space<vmem>>) attributes {dimension_semantics = [#tpu.dimension_semantics<parallel>], iteration_bounds = array<i64: 1>, scalar_prefetch = 0 : i64, scratch_operands = 0 : i64, tpu.core_type = #tpu.core_type<tc>, window_params = [{transform_indices = @transform_0, window_bounds = array<i64: 8, 128>}, {pipeline_mode = #tpu.pipeline_mode<synchronous>, transform_indices = @transform_1, window_bounds = array<i64: 128, 128>}, {pipeline_mode = #tpu.pipeline_mode<synchronous>, transform_indices = @transform_2, window_bounds = array<i64: 128, 128>}, {pipeline_mode = #tpu.pipeline_mode<synchronous>, transform_indices = @transform_3, window_bounds = array<i64: 4, 128>}, {transform_indices = @transform_4, window_bounds = array<i64: 8, 128>}]} {
    %c0 = arith.constant 0 : index
    %c0_0 = arith.constant 0 : index
    %0 = vector.load %arg4[%c0, %c0_0] : memref<4x128xf32, #tpu.memory_space<vmem>>, vector<1x128xf32>
    %c1 = arith.constant 1 : index
    %c0_1 = arith.constant 0 : index
    %1 = vector.load %arg4[%c1, %c0_1] : memref<4x128xf32, #tpu.memory_space<vmem>>, vector<1x128xf32>
    %c2 = arith.constant 2 : index
    %c0_2 = arith.constant 0 : index
    %2 = vector.load %arg4[%c2, %c0_2] : memref<4x128xf32, #tpu.memory_space<vmem>>, vector<1x128xf32>
    %c3 = arith.constant 3 : index
    %c0_3 = arith.constant 0 : index
    %3 = vector.load %arg4[%c3, %c0_3] : memref<4x128xf32, #tpu.memory_space<vmem>>, vector<1x128xf32>
    %c0_4 = arith.constant 0 : index
    %c0_5 = arith.constant 0 : index
    %4 = vector.load %arg1[%c0_4, %c0_5] : memref<8x128xf32, #tpu.memory_space<vmem>>, vector<8x128xf32>
    %5 = vector.broadcast %0 : vector<1x128xf32> to vector<8x128xf32>
    %6 = arith.mulf %4, %5 : vector<8x128xf32>
    %7 = vector.broadcast %1 : vector<1x128xf32> to vector<8x128xf32>
    %8 = arith.addf %6, %7 : vector<8x128xf32>
    %cst = arith.constant 0.000000e+00 : f32
    %9 = vector.broadcast %cst : f32 to vector<8x128xf32>
    %10 = arith.maximumf %8, %9 : vector<8x128xf32>
    %c0_6 = arith.constant 0 : index
    %c0_7 = arith.constant 0 : index
    %11 = vector.load %arg2[%c0_6, %c0_7] : memref<128x128xf32, #tpu.memory_space<vmem>>, vector<128x128xf32>
    %cst_8 = arith.constant dense<0.000000e+00> : vector<8x128xf32>
    %12 = tpu.matmul %10, %11, %cst_8 {dimension_numbers = #tpu.dot_dimension_numbers<[1], [1], [0], [0], [0, 0, 1, 0], [], []>} : vector<8x128xf32>, vector<128x128xf32>, vector<8x128xf32> -> vector<8x128xf32>
    %13 = vector.broadcast %2 : vector<1x128xf32> to vector<8x128xf32>
    %14 = arith.addf %12, %13 : vector<8x128xf32>
    %cst_9 = arith.constant 0.000000e+00 : f32
    %15 = vector.broadcast %cst_9 : f32 to vector<8x128xf32>
    %16 = arith.maximumf %14, %15 : vector<8x128xf32>
    %c0_10 = arith.constant 0 : index
    %c0_11 = arith.constant 0 : index
    %17 = vector.load %arg3[%c0_10, %c0_11] : memref<128x128xf32, #tpu.memory_space<vmem>>, vector<128x128xf32>
    %cst_12 = arith.constant dense<0.000000e+00> : vector<8x128xf32>
    %18 = tpu.matmul %16, %17, %cst_12 {dimension_numbers = #tpu.dot_dimension_numbers<[1], [1], [0], [0], [0, 0, 1, 0], [], []>} : vector<8x128xf32>, vector<128x128xf32>, vector<8x128xf32> -> vector<8x128xf32>
    %19 = vector.broadcast %3 : vector<1x128xf32> to vector<8x128xf32>
    %20 = arith.addf %18, %19 : vector<8x128xf32>
    %c0_13 = arith.constant 0 : index
    %c0_14 = arith.constant 0 : index
    %21 = vector.load %arg5[%c0_13, %c0_14] : memref<8x128xf32, #tpu.memory_space<vmem>>, vector<8x128xf32>
    tpu.vector_store %arg5[%c0_13, %c0_14], %20 {strides = array<i32>} : memref<8x128xf32, #tpu.memory_space<vmem>>, vector<8x128xf32>,
    return
  }
  func.func @transform_0(%arg0: i32) -> (i32, i32) {
    %c0_i32 = arith.constant 0 : i32
    %c0_i32_0 = arith.constant 0 : i32
    return %arg0, %c0_i32 : i32, i32
  }
  func.func @transform_1(%arg0: i32) -> (i32, i32) {
    %c0_i32 = arith.constant 0 : i32
    %c0_i32_0 = arith.constant 0 : i32
    %c0_i32_1 = arith.constant 0 : i32
    return %c0_i32, %c0_i32_0 : i32, i32
  }
  func.func @transform_2(%arg0: i32) -> (i32, i32) {
    %c0_i32 = arith.constant 0 : i32
    %c0_i32_0 = arith.constant 0 : i32
    %c0_i32_1 = arith.constant 0 : i32
    return %c0_i32, %c0_i32_0 : i32, i32
  }
  func.func @transform_3(%arg0: i32) -> (i32, i32) {
    %c0_i32 = arith.constant 0 : i32
    %c0_i32_0 = arith.constant 0 : i32
    %c0_i32_1 = arith.constant 0 : i32
    return %c0_i32, %c0_i32_0 : i32, i32
  }
  func.func @transform_4(%arg0: i32) -> (i32, i32) {
    %c0_i32 = arith.constant 0 : i32
    %c0_i32_0 = arith.constant 0 : i32
    return %arg0, %c0_i32 : i32, i32
  }
}

</mosaic_0001>

<llo_original>
// kernel: mlp_forward.2
$region0: #{mlp_forward.2}
  #allocation0 [shape = 'u32[]', space=smem, size = 0x4, offset = 0x4, fixed_abs, tag = 'smem constant byte address 0x4 - core index']
  #allocation1 [shape = 'u32[144,128]{1,0:T(1,128)}', space=vmem, size = 0x12000, scoped, tag = 'internal scratch']
  %s0 = inlined_call_operand.vmem [shape: f32[8,128], index: 0, kind: input, shape index: {}]
  %s1 = inlined_call_operand.vmem [shape: f32[128,128], index: 1, kind: input, shape index: {}]
  %s2 = inlined_call_operand.vmem [shape: f32[128,128], index: 2, kind: input, shape index: {}]
  %s3 = inlined_call_operand.vmem [shape: f32[2,128], index: 3, kind: input, shape index: {}]
  %s4 = inlined_call_operand.hbm [shape: f32[8,128], index: 4, kind: output, shape index: {0}]
  %s5 = inlined_call_operand.hbm [shape: f32[8,128], index: 5, kind: output, shape index: {1}]
  %s6 = inlined_call_operand.vmem [shape: f32[8,128], index: 6, kind: output, shape index: {2}]
  %s7 = inlined_call_operand.vmem [shape: f32[8,128], index: 7, kind: output, shape index: {3}]
  %s8 = inlined_call_operand.vmem [shape: f32[8,128], index: 8, kind: output, shape index: {4}]
  %9 = xla_tuple %s4, %s5, %s6, %s7, %s8
  %s10 = sld [smem:[#allocation0]]
  $region58: #{mlp_forward.2} parent=0
    _
  %s12 = ssub.s32 1, %s10
  %s13 = scalar_select 0, %s12, %s10
  $region1: #{mlp_forward.2} parent=0
    #allocation2 [shape = 'u8[4096]{0}', space=vmem, size = 0x1000, scoped, tag = 'output window, operand 0, single buffered']
    #allocation3 [shape = 's32[1]{0}', space=sflag, size = 0x4, scoped, tag = 'scoped memory for mlp_forward.2']
    #allocation4 [shape = 'u8[4096]{0}', space=vmem, size = 0x1000, scoped, tag = 'output window, operand 1, single buffered']
    #allocation5 [shape = 's32[1]{0}', space=sflag, size = 0x4, scoped, tag = 'scoped memory for mlp_forward.2']
    %14 = vsyncpa [#allocation3], 0
    %15 = vsyncpa [#allocation5], 0
    // Predicated region
    $region2: #{mlp_forward.2} parent=1 // pred_check
      _
    $region3: #{mlp_forward.2} parent=1 // pred_check_branch
      %17 = sbr.rel (0) target = $region5
    $region4: #{mlp_forward.2} parent=1 // pred_region
      _
    $region5: #{mlp_forward.2} parent=1 // pred_fallthru
      _
    // Predicated region
    $region6: #{mlp_forward.2} parent=1 // pred_check
      _
    $region7: #{mlp_forward.2} parent=1 // pred_check_branch
      %19 = sbr.rel (0) target = $region9
    $region8: #{mlp_forward.2} parent=1 // pred_region
      _
    $region9: #{mlp_forward.2} parent=1 // pred_fallthru
      _
    // Predicated region
    $region10: #{mlp_forward.2} parent=1 // pred_check
      _
    $region11: #{mlp_forward.2} parent=1 // pred_check_branch
      %21 = sbr.rel (0) target = $region13
    $region12: #{mlp_forward.2} parent=1 // pred_region
      _
    $region13: #{mlp_forward.2} parent=1 // pred_fallthru
      _
    // Predicated region
    $region14: #{mlp_forward.2} parent=1 // pred_check
      _
    $region15: #{mlp_forward.2} parent=1 // pred_check_branch
      %23 = sbr.rel (0) target = $region17
    $region16: #{mlp_forward.2} parent=1 // pred_region
      _
    $region17: #{mlp_forward.2} parent=1 // pred_fallthru
      _
    %v24 = vld [vmem:[%s0] sm:$0xff]
    %v25 = vld [vmem:[%s3] sm:$0x1]
    %v26 = vld [vmem:[%s3 + $0x1] sm:$0x1]
    %v27 = vld [vmem:[%s1] sm:$0xff]
    %v28 = vld [vmem:[%s1 + $0x8] sm:$0xff]
    %v29 = vld [vmem:[%s1 + $0x10] sm:$0xff]
    %v30 = vld [vmem:[%s1 + $0x18] sm:$0xff]
    %v31 = vld [vmem:[%s1 + $0x20] sm:$0xff]
    %v32 = vld [vmem:[%s1 + $0x28] sm:$0xff]
    %v33 = vld [vmem:[%s1 + $0x30] sm:$0xff]
    %v34 = vld [vmem:[%s1 + $0x38] sm:$0xff]
    %v35 = vld [vmem:[%s1 + $0x40] sm:$0xff]
    %v36 = vld [vmem:[%s1 + $0x48] sm:$0xff]
    %v37 = vld [vmem:[%s1 + $0x50] sm:$0xff]
    %v38 = vld [vmem:[%s1 + $0x58] sm:$0xff]
    %v39 = vld [vmem:[%s1 + $0x60] sm:$0xff]
    %v40 = vld [vmem:[%s1 + $0x68] sm:$0xff]
    %v41 = vld [vmem:[%s1 + $0x70] sm:$0xff]
    %v42 = vld [vmem:[%s1 + $0x78] sm:$0xff]
    %v43 = vlaneseq
    %v44 = vshrl.u32 %v43, 7
    %v45 = vsub.s32 0, %v44
    %v46 = vrot.slane %v25, %v45
    %47 = vmatprep.subr.mxu0 0.0
    %48 = vmatpush1.xpose.msra.mxu0 %v42
    %49 = vmatprep.subr.mxu0 0.0
    %50 = vmatpush1.xpose.msra.mxu0 %v41
    %51 = vmatprep.subr.mxu0 0.0
    %52 = vmatpush1.xpose.msra.mxu0 %v40
    %53 = vmatprep.subr.mxu0 0.0
    %54 = vmatpush1.xpose.msra.mxu0 %v39
    %55 = vmatprep.subr.mxu0 0.0
    %56 = vmatpush1.xpose.msra.mxu0 %v38
    %57 = vmatprep.subr.mxu0 0.0
    %58 = vmatpush1.xpose.msra.mxu0 %v37
    %59 = vmatprep.subr.mxu0 0.0
    %60 = vmatpush1.xpose.msra.mxu0 %v36
    %61 = vmatprep.subr.mxu0 0.0
    %62 = vmatpush1.xpose.msra.mxu0 %v35
    %63 = vmatprep.subr.mxu0 0.0
    %64 = vmatpush1.xpose.msra.mxu0 %v34
    %65 = vmatprep.subr.mxu0 0.0
    %66 = vmatpush1.xpose.msra.mxu0 %v33
    %67 = vmatprep.subr.mxu0 0.0
    %68 = vmatpush1.xpose.msra.mxu0 %v32
    %69 = vmatprep.subr.mxu0 0.0
    %70 = vmatpush1.xpose.msra.mxu0 %v31
    %71 = vmatprep.subr.mxu0 0.0
    %72 = vmatpush1.xpose.msra.mxu0 %v30
    %73 = vmatprep.subr.mxu0 0.0
    %74 = vmatpush1.xpose.msra.mxu0 %v29
    %75 = vmatprep.subr.mxu0 0.0
    %76 = vmatpush1.xpose.msra.mxu0 %v28
    %77 = vmatprep.subr.mxu0 0.0
    %78 = vmatpush1.xpose.msra.mxu0 %v27
    %79 = vmatprep.subr.mxu0 0.0
    %80 = vmatpush2.xpose.msra.mxu0 0.0
    %81 = vmatprep.subr.mxu0 0.0
    %82 = vmatpush2.xpose.msra.mxu0 0.0
    %83 = vmatprep.subr.mxu0 0.0
    %84 = vmatpush2.xpose.msra.mxu0 0.0
    %85 = vmatprep.subr.mxu0 0.0
    %86 = vmatpush2.xpose.msra.mxu0 0.0
    %87 = vmatprep.subr.mxu0 0.0
    %88 = vmatpush2.xpose.msra.mxu0 0.0
    %89 = vmatprep.subr.mxu0 0.0
    %90 = vmatpush2.xpose.msra.mxu0 0.0
    %91 = vmatprep.subr.mxu0 0.0
    %92 = vmatpush2.xpose.msra.mxu0 0.0
    %93 = vmatprep.subr.mxu0 0.0
    %94 = vmatpush2.xpose.msra.mxu0 0.0
    %95 = vmatprep.subr.mxu0 0.0
    %96 = vmatpush2.xpose.msra.mxu0 0.0
    %97 = vmatprep.subr.mxu0 0.0
    %98 = vmatpush2.xpose.msra.mxu0 0.0
    %99 = vmatprep.subr.mxu0 0.0
    %100 = vmatpush2.xpose.msra.mxu0 0.0
    %101 = vmatprep.subr.mxu0 0.0
    %102 = vmatpush2.xpose.msra.mxu0 0.0
    %103 = vmatprep.subr.mxu0 0.0
    %104 = vmatpush2.xpose.msra.mxu0 0.0
    %105 = vmatprep.subr.mxu0 0.0
    %106 = vmatpush2.xpose.msra.mxu0 0.0
    %107 = vmatprep.subr.mxu0 0.0
    %108 = vmatpush2.xpose.msra.mxu0 0.0
    %109 = vmatprep.subr.mxu0 0.0
    %110 = vmatpush2.xpose.msra.mxu0 0.0
    %111 = vmatprep.mubr.f32.mxu0 0.0
    %112 = vmatmul.mubr.f32.gmra.mxu0 %v24
    %v113 = vpop.f32.mrf.mxu0
    %v114 = vadd.f32 %v46, %v113
    %v115 = vpop.f32.mrf.mxu0
    %116 = vdwg.mxu0
    %v117 = vtanh.pop %v114
    %118 = vst [vmem:[#allocation2] sm:$0xff] %v117
    %v119 = vmul.f32 %v117, 1.442695
    %v120 = vpow.pop %v119
    %v121 = vmul.f32 %v24, %v120
    %122 = vst [vmem:[#allocation4] sm:$0xff] %v121
    %v123 = vld [vmem:[%s2] sm:$0xff]
    %v124 = vld [vmem:[%s2 + $0x8] sm:$0xff]
    %v125 = vld [vmem:[%s2 + $0x10] sm:$0xff]
    %v126 = vld [vmem:[%s2 + $0x18] sm:$0xff]
    %v127 = vld [vmem:[%s2 + $0x20] sm:$0xff]
    %v128 = vld [vmem:[%s2 + $0x28] sm:$0xff]
    %v129 = vld [vmem:[%s2 + $0x30] sm:$0xff]
    %v130 = vld [vmem:[%s2 + $0x38] sm:$0xff]
    %v131 = vld [vmem:[%s2 + $0x40] sm:$0xff]
    %v132 = vld [vmem:[%s2 + $0x48] sm:$0xff]
    %v133 = vld [vmem:[%s2 + $0x50] sm:$0xff]
    %v134 = vld [vmem:[%s2 + $0x58] sm:$0xff]
    %v135 = vld [vmem:[%s2 + $0x60] sm:$0xff]
    %v136 = vld [vmem:[%s2 + $0x68] sm:$0xff]
    %v137 = vld [vmem:[%s2 + $0x70] sm:$0xff]
    %v138 = vld [vmem:[%s2 + $0x78] sm:$0xff]
    %v139 = vlaneseq
    %v140 = vshrl.u32 %v139, 7
    %v141 = vsub.s32 0, %v140
    %v142 = vrot.slane %v26, %v141
    %143 = vmatprep.subr.mxu0 0.0
    %144 = vmatpush1.xpose.msra.mxu0 %v138
    %145 = vmatprep.subr.mxu0 0.0
    %146 = vmatpush1.xpose.msra.mxu0 %v137
    %147 = vmatprep.subr.mxu0 0.0
    %148 = vmatpush1.xpose.msra.mxu0 %v136
    %149 = vmatprep.subr.mxu0 0.0
    %150 = vmatpush1.xpose.msra.mxu0 %v135
    %151 = vmatprep.subr.mxu0 0.0
    %152 = vmatpush1.xpose.msra.mxu0 %v134
    %153 = vmatprep.subr.mxu0 0.0
    %154 = vmatpush1.xpose.msra.mxu0 %v133
    %155 = vmatprep.subr.mxu0 0.0
    %156 = vmatpush1.xpose.msra.mxu0 %v132
    %157 = vmatprep.subr.mxu0 0.0
    %158 = vmatpush1.xpose.msra.mxu0 %v131
    %159 = vmatprep.subr.mxu0 0.0
    %160 = vmatpush1.xpose.msra.mxu0 %v130
    %161 = vmatprep.subr.mxu0 0.0
    %162 = vmatpush1.xpose.msra.mxu0 %v129
    %163 = vmatprep.subr.mxu0 0.0
    %164 = vmatpush1.xpose.msra.mxu0 %v128
    %165 = vmatprep.subr.mxu0 0.0
    %166 = vmatpush1.xpose.msra.mxu0 %v127
    %167 = vmatprep.subr.mxu0 0.0
    %168 = vmatpush1.xpose.msra.mxu0 %v126
    %169 = vmatprep.subr.mxu0 0.0
    %170 = vmatpush1.xpose.msra.mxu0 %v125
    %171 = vmatprep.subr.mxu0 0.0
    %172 = vmatpush1.xpose.msra.mxu0 %v124
    %173 = vmatprep.subr.mxu0 0.0
    %174 = vmatpush1.xpose.msra.mxu0 %v123
    %175 = vmatprep.subr.mxu0 0.0
    %176 = vmatpush2.xpose.msra.mxu0 0.0
    %177 = vmatprep.subr.mxu0 0.0
    %178 = vmatpush2.xpose.msra.mxu0 0.0
    %179 = vmatprep.subr.mxu0 0.0
    %180 = vmatpush2.xpose.msra.mxu0 0.0
    %181 = vmatprep.subr.mxu0 0.0
    %182 = vmatpush2.xpose.msra.mxu0 0.0
    %183 = vmatprep.subr.mxu0 0.0
    %184 = vmatpush2.xpose.msra.mxu0 0.0
    %185 = vmatprep.subr.mxu0 0.0
    %186 = vmatpush2.xpose.msra.mxu0 0.0
    %187 = vmatprep.subr.mxu0 0.0
    %188 = vmatpush2.xpose.msra.mxu0 0.0
    %189 = vmatprep.subr.mxu0 0.0
    %190 = vmatpush2.xpose.msra.mxu0 0.0
    %191 = vmatprep.subr.mxu0 0.0
    %192 = vmatpush2.xpose.msra.mxu0 0.0
    %193 = vmatprep.subr.mxu0 0.0
    %194 = vmatpush2.xpose.msra.mxu0 0.0
    %195 = vmatprep.subr.mxu0 0.0
    %196 = vmatpush2.xpose.msra.mxu0 0.0
    %197 = vmatprep.subr.mxu0 0.0
    %198 = vmatpush2.xpose.msra.mxu0 0.0
    %199 = vmatprep.subr.mxu0 0.0
    %200 = vmatpush2.xpose.msra.mxu0 0.0
    %201 = vmatprep.subr.mxu0 0.0
    %202 = vmatpush2.xpose.msra.mxu0 0.0
    %203 = vmatprep.subr.mxu0 0.0
    %204 = vmatpush2.xpose.msra.mxu0 0.0
    %205 = vmatprep.subr.mxu0 0.0
    %206 = vmatpush2.xpose.msra.mxu0 0.0
    %207 = vmatprep.mubr.f32.mxu0 0.0
    %208 = vmatmul.mubr.f32.gmra.mxu0 %v121
    %v209 = vpop.f32.mrf.mxu0
    %v210 = vadd.f32 %v142, %v209
    %v211 = vpop.f32.mrf.mxu0
    %212 = vdwg.mxu0
    %213 = vst [vmem:[%s6] sm:$0xff] %v210
    %s214 = smul.u32 0, 8
    %v215 = vlaneseq
    %v216 = vshrl.u32 %v215, 7
    %v217 = vstv %s214
    %v218 = vadd.s32 %v217, %v216
    %vm219 = vcmp.lt.s32.totalorder %v218, 8
    %v220 = vsel %vm219, 1, 0
    %v221 = vcvt.s32.f32 %v220
    %v222 = vmul.f32 %v210, %v221
    %v223 = vadd.f32 %v222, 0.0
    %224 = vst [vmem:[%s7] sm:$0xff] %v223
    %v225 = vmul.f32 %v222, %v222
    %v226 = vadd.f32 %v225, 0.0
    %227 = vst [vmem:[%s8] sm:$0xff] %v226
    // Predicated region
    $region18: #{mlp_forward.2} parent=1 // pred_check
      _
    $region19: #{mlp_forward.2} parent=1 // pred_check_branch
      %229 = sbr.rel (0) target = $region21
    $region20: #{mlp_forward.2} parent=1 // pred_region
      %s231 = ssub.s32 128, 128
      %232 = vsyncadd [#allocation3], %s231
      %s234 = sshll.u32 [#allocation2], 4
      %s235 = int_to_ptr.vmem [resolvable:$true] %s234
      %237 = dma.vmem_to_hbm [thread:$0]  %s235, 128, %s4, [#allocation3]
    $region21: #{mlp_forward.2} parent=1 // pred_fallthru
      _
    // Predicated region
    $region22: #{mlp_forward.2} parent=1 // pred_check
      _
    $region23: #{mlp_forward.2} parent=1 // pred_check_branch
      %239 = sbr.rel (0) target = $region25
    $region24: #{mlp_forward.2} parent=1 // pred_region
      %s241 = ssub.s32 128, 128
      %242 = vsyncadd [#allocation5], %s241
      %s244 = sshll.u32 [#allocation4], 4
      %s245 = int_to_ptr.vmem [resolvable:$true] %s244
      %247 = dma.vmem_to_hbm [thread:$0]  %s245, 128, %s5, [#allocation5]
    $region25: #{mlp_forward.2} parent=1 // pred_fallthru
      _
    // Predicated region
    $region26: #{mlp_forward.2} parent=1 // pred_check
      _
    $region27: #{mlp_forward.2} parent=1 // pred_check_branch
      %249 = sbr.rel (0) target = $region29
    $region28: #{mlp_forward.2} parent=1 // pred_region
      _
    $region29: #{mlp_forward.2} parent=1 // pred_fallthru
      _
    // Predicated region
    $region30: #{mlp_forward.2} parent=1 // pred_check
      _
    $region31: #{mlp_forward.2} parent=1 // pred_check_branch
      %251 = sbr.rel (0) target = $region33
    $region32: #{mlp_forward.2} parent=1 // pred_region
      _
    $region33: #{mlp_forward.2} parent=1 // pred_fallthru
      _
    // Predicated region
    $region34: #{mlp_forward.2} parent=1 // pred_check
      _
    $region35: #{mlp_forward.2} parent=1 // pred_check_branch
      %253 = sbr.rel (0) target = $region37
    $region36: #{mlp_forward.2} parent=1 // pred_region
      _
    $region37: #{mlp_forward.2} parent=1 // pred_fallthru
      _
    // Predicated region
    $region38: #{mlp_forward.2} parent=1 // pred_check
      _
    $region39: #{mlp_forward.2} parent=1 // pred_check_branch
      %255 = sbr.rel (0) target = $region41
    $region40: #{mlp_forward.2} parent=1 // pred_region
      %256 = dma.done [#allocation3], 128
    $region41: #{mlp_forward.2} parent=1 // pred_fallthru
      _
    // Predicated region
    $region42: #{mlp_forward.2} parent=1 // pred_check
      _
    $region43: #{mlp_forward.2} parent=1 // pred_check_branch
      %258 = sbr.rel (0) target = $region45
    $region44: #{mlp_forward.2} parent=1 // pred_region
      %259 = dma.done [#allocation5], 128
    $region45: #{mlp_forward.2} parent=1 // pred_fallthru
      _
    // Predicated region
    $region46: #{mlp_forward.2} parent=1 // pred_check
      _
    $region47: #{mlp_forward.2} parent=1 // pred_check_branch
      %261 = sbr.rel (0) target = $region49
    $region48: #{mlp_forward.2} parent=1 // pred_region
      _
    $region49: #{mlp_forward.2} parent=1 // pred_fallthru
      _
    // Predicated region
    $region50: #{mlp_forward.2} parent=1 // pred_check
      _
    $region51: #{mlp_forward.2} parent=1 // pred_check_branch
      %263 = sbr.rel (0) target = $region53
    $region52: #{mlp_forward.2} parent=1 // pred_region
      _
    $region53: #{mlp_forward.2} parent=1 // pred_fallthru
      _
    // Predicated region
    $region54: #{mlp_forward.2} parent=1 // pred_check
      _
    $region55: #{mlp_forward.2} parent=1 // pred_check_branch
      %265 = sbr.rel (0) target = $region57
    $region56: #{mlp_forward.2} parent=1 // pred_region
      _
    $region57: #{mlp_forward.2} parent=1 // pred_fallthru
      _
    %266 = vsyncpa [#allocation3], 1
    %267 = vsyncpa [#allocation5], 1

// kernel: mlp_forward.3
$region0: #{mlp_forward.3}
  #allocation0 [shape = 'u32[]', space=smem, size = 0x4, offset = 0x4, fixed_abs, tag = 'smem constant byte address 0x4 - core index']
  #allocation1 [shape = 'u32[144,128]{1,0:T(1,128)}', space=vmem, size = 0x12000, scoped, tag = 'internal scratch']
  %s0 = inlined_call_operand.vmem [shape: f32[8,128], index: 0, kind: input, shape index: {}]
  %s1 = inlined_call_operand.vmem [shape: f32[128,128], index: 1, kind: input, shape index: {}]
  %s2 = inlined_call_operand.vmem [shape: f32[128,128], index: 2, kind: input, shape index: {}]
  %s3 = inlined_call_operand.vmem [shape: f32[4,128], index: 3, kind: input, shape index: {}]
  %s4 = inlined_call_operand.hbm [shape: f32[8,128], index: 4, kind: output, shape index: {}]
  %s5 = sld [smem:[#allocation0]]
  $region26: #{mlp_forward.3} parent=0
    _
  %s7 = ssub.s32 1, %s5
  %s8 = scalar_select 0, %s7, %s5
  $region1: #{mlp_forward.3} parent=0
    #allocation2 [shape = 'u8[4096]{0}', space=vmem, size = 0x1000, scoped, tag = 'output window, operand 0, single buffered']
    #allocation3 [shape = 's32[1]{0}', space=sflag, size = 0x4, scoped, tag = 'scoped memory for mlp_forward.3']
    %9 = vsyncpa [#allocation3], 0
    // Predicated region
    $region2: #{mlp_forward.3} parent=1 // pred_check
      _
    $region3: #{mlp_forward.3} parent=1 // pred_check_branch
      %11 = sbr.rel (0) target = $region5
    $region4: #{mlp_forward.3} parent=1 // pred_region
      _
    $region5: #{mlp_forward.3} parent=1 // pred_fallthru
      _
    // Predicated region
    $region6: #{mlp_forward.3} parent=1 // pred_check
      _
    $region7: #{mlp_forward.3} parent=1 // pred_check_branch
      %13 = sbr.rel (0) target = $region9
    $region8: #{mlp_forward.3} parent=1 // pred_region
      _
    $region9: #{mlp_forward.3} parent=1 // pred_fallthru
      _
    // Predicated region
    $region10: #{mlp_forward.3} parent=1 // pred_check
      _
    $region11: #{mlp_forward.3} parent=1 // pred_check_branch
      %15 = sbr.rel (0) target = $region13
    $region12: #{mlp_forward.3} parent=1 // pred_region
      _
    $region13: #{mlp_forward.3} parent=1 // pred_fallthru
      _
    // Predicated region
    $region14: #{mlp_forward.3} parent=1 // pred_check
      _
    $region15: #{mlp_forward.3} parent=1 // pred_check_branch
      %17 = sbr.rel (0) target = $region17
    $region16: #{mlp_forward.3} parent=1 // pred_region
      _
    $region17: #{mlp_forward.3} parent=1 // pred_fallthru
      _
    %v18 = vld [vmem:[%s3] sm:$0x1]
    %v19 = vld [vmem:[%s3 + $0x1] sm:$0x1]
    %v20 = vld [vmem:[%s3 + $0x2] sm:$0x1]
    %v21 = vld [vmem:[%s3 + $0x3] sm:$0x1]
    %v22 = vld [vmem:[%s0] sm:$0xff]
    %v23 = vlaneseq
    %v24 = vshrl.u32 %v23, 7
    %v25 = vsub.s32 0, %v24
    %v26 = vrot.slane %v18, %v25
    %v27 = vmul.f32 %v22, %v26
    %v28 = vlaneseq
    %v29 = vshrl.u32 %v28, 7
    %v30 = vsub.s32 0, %v29
    %v31 = vrot.slane %v19, %v30
    %v32 = vadd.f32 %v27, %v31
    %v33 = vmax.f32 %v32, 0.0
    %v34 = vld [vmem:[%s1] sm:$0xff]
    %v35 = vld [vmem:[%s1 + $0x8] sm:$0xff]
    %v36 = vld [vmem:[%s1 + $0x10] sm:$0xff]
    %v37 = vld [vmem:[%s1 + $0x18] sm:$0xff]
    %v38 = vld [vmem:[%s1 + $0x20] sm:$0xff]
    %v39 = vld [vmem:[%s1 + $0x28] sm:$0xff]
    %v40 = vld [vmem:[%s1 + $0x30] sm:$0xff]
    %v41 = vld [vmem:[%s1 + $0x38] sm:$0xff]
    %v42 = vld [vmem:[%s1 + $0x40] sm:$0xff]
    %v43 = vld [vmem:[%s1 + $0x48] sm:$0xff]
    %v44 = vld [vmem:[%s1 + $0x50] sm:$0xff]
    %v45 = vld [vmem:[%s1 + $0x58] sm:$0xff]
    %v46 = vld [vmem:[%s1 + $0x60] sm:$0xff]
    %v47 = vld [vmem:[%s1 + $0x68] sm:$0xff]
    %v48 = vld [vmem:[%s1 + $0x70] sm:$0xff]
    %v49 = vld [vmem:[%s1 + $0x78] sm:$0xff]
    %v50 = vlaneseq
    %v51 = vshrl.u32 %v50, 7
    %v52 = vsub.s32 0, %v51
    %v53 = vrot.slane %v20, %v52
    %54 = vmatprep.subr.mxu0 0.0
    %55 = vmatpush1.xpose.msra.mxu0 %v49
    %56 = vmatprep.subr.mxu0 0.0
    %57 = vmatpush1.xpose.msra.mxu0 %v48
    %58 = vmatprep.subr.mxu0 0.0
    %59 = vmatpush1.xpose.msra.mxu0 %v47
    %60 = vmatprep.subr.mxu0 0.0
    %61 = vmatpush1.xpose.msra.mxu0 %v46
    %62 = vmatprep.subr.mxu0 0.0
    %63 = vmatpush1.xpose.msra.mxu0 %v45
    %64 = vmatprep.subr.mxu0 0.0
    %65 = vmatpush1.xpose.msra.mxu0 %v44
    %66 = vmatprep.subr.mxu0 0.0
    %67 = vmatpush1.xpose.msra.mxu0 %v43
    %68 = vmatprep.subr.mxu0 0.0
    %69 = vmatpush1.xpose.msra.mxu0 %v42
    %70 = vmatprep.subr.mxu0 0.0
    %71 = vmatpush1.xpose.msra.mxu0 %v41
    %72 = vmatprep.subr.mxu0 0.0
    %73 = vmatpush1.xpose.msra.mxu0 %v40
    %74 = vmatprep.subr.mxu0 0.0
    %75 = vmatpush1.xpose.msra.mxu0 %v39
    %76 = vmatprep.subr.mxu0 0.0
    %77 = vmatpush1.xpose.msra.mxu0 %v38
    %78 = vmatprep.subr.mxu0 0.0
    %79 = vmatpush1.xpose.msra.mxu0 %v37
    %80 = vmatprep.subr.mxu0 0.0
    %81 = vmatpush1.xpose.msra.mxu0 %v36
    %82 = vmatprep.subr.mxu0 0.0
    %83 = vmatpush1.xpose.msra.mxu0 %v35
    %84 = vmatprep.subr.mxu0 0.0
    %85 = vmatpush1.xpose.msra.mxu0 %v34
    %86 = vmatprep.subr.mxu0 0.0
    %87 = vmatpush2.xpose.msra.mxu0 0.0
    %88 = vmatprep.subr.mxu0 0.0
    %89 = vmatpush2.xpose.msra.mxu0 0.0
    %90 = vmatprep.subr.mxu0 0.0
    %91 = vmatpush2.xpose.msra.mxu0 0.0
    %92 = vmatprep.subr.mxu0 0.0
    %93 = vmatpush2.xpose.msra.mxu0 0.0
    %94 = vmatprep.subr.mxu0 0.0
    %95 = vmatpush2.xpose.msra.mxu0 0.0
    %96 = vmatprep.subr.mxu0 0.0
    %97 = vmatpush2.xpose.msra.mxu0 0.0
    %98 = vmatprep.subr.mxu0 0.0
    %99 = vmatpush2.xpose.msra.mxu0 0.0
    %100 = vmatprep.subr.mxu0 0.0
    %101 = vmatpush2.xpose.msra.mxu0 0.0
    %102 = vmatprep.subr.mxu0 0.0
    %103 = vmatpush2.xpose.msra.mxu0 0.0
    %104 = vmatprep.subr.mxu0 0.0
    %105 = vmatpush2.xpose.msra.mxu0 0.0
    %106 = vmatprep.subr.mxu0 0.0
    %107 = vmatpush2.xpose.msra.mxu0 0.0
    %108 = vmatprep.subr.mxu0 0.0
    %109 = vmatpush2.xpose.msra.mxu0 0.0
    %110 = vmatprep.subr.mxu0 0.0
    %111 = vmatpush2.xpose.msra.mxu0 0.0
    %112 = vmatprep.subr.mxu0 0.0
    %113 = vmatpush2.xpose.msra.mxu0 0.0
    %114 = vmatprep.subr.mxu0 0.0
    %115 = vmatpush2.xpose.msra.mxu0 0.0
    %116 = vmatprep.subr.mxu0 0.0
    %117 = vmatpush2.xpose.msra.mxu0 0.0
    %118 = vmatprep.mubr.f32.mxu0 0.0
    %119 = vmatmul.mubr.f32.gmra.mxu0 %v33
    %v120 = vpop.f32.mrf.mxu0
    %v121 = vadd.f32 %v53, %v120
    %v122 = vpop.f32.mrf.mxu0
    %123 = vdwg.mxu0
    %v124 = vmax.f32 %v121, 0.0
    %v125 = vld [vmem:[%s2] sm:$0xff]
    %v126 = vld [vmem:[%s2 + $0x8] sm:$0xff]
    %v127 = vld [vmem:[%s2 + $0x10] sm:$0xff]
    %v128 = vld [vmem:[%s2 + $0x18] sm:$0xff]
    %v129 = vld [vmem:[%s2 + $0x20] sm:$0xff]
    %v130 = vld [vmem:[%s2 + $0x28] sm:$0xff]
    %v131 = vld [vmem:[%s2 + $0x30] sm:$0xff]
    %v132 = vld [vmem:[%s2 + $0x38] sm:$0xff]
    %v133 = vld [vmem:[%s2 + $0x40] sm:$0xff]
    %v134 = vld [vmem:[%s2 + $0x48] sm:$0xff]
    %v135 = vld [vmem:[%s2 + $0x50] sm:$0xff]
    %v136 = vld [vmem:[%s2 + $0x58] sm:$0xff]
    %v137 = vld [vmem:[%s2 + $0x60] sm:$0xff]
    %v138 = vld [vmem:[%s2 + $0x68] sm:$0xff]
    %v139 = vld [vmem:[%s2 + $0x70] sm:$0xff]
    %v140 = vld [vmem:[%s2 + $0x78] sm:$0xff]
    %v141 = vlaneseq
    %v142 = vshrl.u32 %v141, 7
    %v143 = vsub.s32 0, %v142
    %v144 = vrot.slane %v21, %v143
    %145 = vmatprep.subr.mxu0 0.0
    %146 = vmatpush1.xpose.msra.mxu0 %v140
    %147 = vmatprep.subr.mxu0 0.0
    %148 = vmatpush1.xpose.msra.mxu0 %v139
    %149 = vmatprep.subr.mxu0 0.0
    %150 = vmatpush1.xpose.msra.mxu0 %v138
    %151 = vmatprep.subr.mxu0 0.0
    %152 = vmatpush1.xpose.msra.mxu0 %v137
    %153 = vmatprep.subr.mxu0 0.0
    %154 = vmatpush1.xpose.msra.mxu0 %v136
    %155 = vmatprep.subr.mxu0 0.0
    %156 = vmatpush1.xpose.msra.mxu0 %v135
    %157 = vmatprep.subr.mxu0 0.0
    %158 = vmatpush1.xpose.msra.mxu0 %v134
    %159 = vmatprep.subr.mxu0 0.0
    %160 = vmatpush1.xpose.msra.mxu0 %v133
    %161 = vmatprep.subr.mxu0 0.0
    %162 = vmatpush1.xpose.msra.mxu0 %v132
    %163 = vmatprep.subr.mxu0 0.0
    %164 = vmatpush1.xpose.msra.mxu0 %v131
    %165 = vmatprep.subr.mxu0 0.0
    %166 = vmatpush1.xpose.msra.mxu0 %v130
    %167 = vmatprep.subr.mxu0 0.0
    %168 = vmatpush1.xpose.msra.mxu0 %v129
    %169 = vmatprep.subr.mxu0 0.0
    %170 = vmatpush1.xpose.msra.mxu0 %v128
    %171 = vmatprep.subr.mxu0 0.0
    %172 = vmatpush1.xpose.msra.mxu0 %v127
    %173 = vmatprep.subr.mxu0 0.0
    %174 = vmatpush1.xpose.msra.mxu0 %v126
    %175 = vmatprep.subr.mxu0 0.0
    %176 = vmatpush1.xpose.msra.mxu0 %v125
    %177 = vmatprep.subr.mxu0 0.0
    %178 = vmatpush2.xpose.msra.mxu0 0.0
    %179 = vmatprep.subr.mxu0 0.0
    %180 = vmatpush2.xpose.msra.mxu0 0.0
    %181 = vmatprep.subr.mxu0 0.0
    %182 = vmatpush2.xpose.msra.mxu0 0.0
    %183 = vmatprep.subr.mxu0 0.0
    %184 = vmatpush2.xpose.msra.mxu0 0.0
    %185 = vmatprep.subr.mxu0 0.0
    %186 = vmatpush2.xpose.msra.mxu0 0.0
    %187 = vmatprep.subr.mxu0 0.0
    %188 = vmatpush2.xpose.msra.mxu0 0.0
    %189 = vmatprep.subr.mxu0 0.0
    %190 = vmatpush2.xpose.msra.mxu0 0.0
    %191 = vmatprep.subr.mxu0 0.0
    %192 = vmatpush2.xpose.msra.mxu0 0.0
    %193 = vmatprep.subr.mxu0 0.0
    %194 = vmatpush2.xpose.msra.mxu0 0.0
    %195 = vmatprep.subr.mxu0 0.0
    %196 = vmatpush2.xpose.msra.mxu0 0.0
    %197 = vmatprep.subr.mxu0 0.0
    %198 = vmatpush2.xpose.msra.mxu0 0.0
    %199 = vmatprep.subr.mxu0 0.0
    %200 = vmatpush2.xpose.msra.mxu0 0.0
    %201 = vmatprep.subr.mxu0 0.0
    %202 = vmatpush2.xpose.msra.mxu0 0.0
    %203 = vmatprep.subr.mxu0 0.0
    %204 = vmatpush2.xpose.msra.mxu0 0.0
    %205 = vmatprep.subr.mxu0 0.0
    %206 = vmatpush2.xpose.msra.mxu0 0.0
    %207 = vmatprep.subr.mxu0 0.0
    %208 = vmatpush2.xpose.msra.mxu0 0.0
    %209 = vmatprep.mubr.f32.mxu0 0.0
    %210 = vmatmul.mubr.f32.gmra.mxu0 %v124
    %v211 = vpop.f32.mrf.mxu0
    %v212 = vadd.f32 %v144, %v211
    %v213 = vpop.f32.mrf.mxu0
    %214 = vdwg.mxu0
    %215 = vst [vmem:[#allocation2] sm:$0xff] %v212
    // Predicated region
    $region18: #{mlp_forward.3} parent=1 // pred_check
      _
    $region19: #{mlp_forward.3} parent=1 // pred_check_branch
      %217 = sbr.rel (0) target = $region21
    $region20: #{mlp_forward.3} parent=1 // pred_region
      %s219 = ssub.s32 128, 128
      %220 = vsyncadd [#allocation3], %s219
      %s222 = sshll.u32 [#allocation2], 4
      %s223 = int_to_ptr.vmem [resolvable:$true] %s222
      %225 = dma.vmem_to_hbm [thread:$0]  %s223, 128, %s4, [#allocation3]
    $region21: #{mlp_forward.3} parent=1 // pred_fallthru
      _
    // Predicated region
    $region22: #{mlp_forward.3} parent=1 // pred_check
      _
    $region23: #{mlp_forward.3} parent=1 // pred_check_branch
      %227 = sbr.rel (0) target = $region25
    $region24: #{mlp_forward.3} parent=1 // pred_region
      %228 = dma.done [#allocation3], 128
    $region25: #{mlp_forward.3} parent=1 // pred_fallthru
      _
    %229 = vsyncpa [#allocation3], 1

</llo_original>
